<compile_context>
chip_gen: v7x
topology: tpu7x:2x2x1
jax: 0.10.0
libtpu: 0.0.40
codegen_flags: <defaults>
</compile_context>

<pallas_src>
import jax
import jax.numpy as jnp
from jax.experimental import pallas as pl
from jax.experimental.pallas import tpu as pltpu

AGG_PRIMITIVES = ("sum", "mean", "max", "min")
NUM_OPS = len(AGG_PRIMITIVES)


def _round_up(x: int, m: int) -> int:
    return ((x + m - 1) // m) * m


def _choose_tn(n: int, k: int, d: int, in_bytes: int, out_bytes: int) -> int:
    """Pick the node-tile size from a VMEM budget, keeping >=2 grid steps."""
    VMEM_IO_BUDGET = 16 * 1024 * 1024   # double-buffered in + out tiles
    MAX_TN = 2048
    TARGET_STEPS = 2                    # keep the grid shardable on v7x (2 TCs)

    per_node = 2 * (k * d * in_bytes + d * out_bytes)   # 2x = double buffering
    tn_vmem = max(8, min(MAX_TN, (VMEM_IO_BUDGET // per_node) // 8 * 8))
    tn_work = max(8, _round_up(pl.cdiv(n, TARGET_STEPS), 8))
    return min(tn_vmem, tn_work)


def agg_mix_kernel(w_ref, msg_ref, out_ref):
    # w_ref   : SMEM  f32[4]              (mixing weights, scalar-prefetched)
    # msg_ref : VMEM  [tn, K, D] tile     (messages for tn nodes)
    # out_ref : VMEM  [tn, D]   tile      (mixed aggregation)
    m = msg_ref[...]                      # native dtype, no full-tile upcast
    k = m.shape[1]

    # Reductions over the neighbor axis K.  Sum accumulates in f32 without
    # materializing an f32 copy of the whole (tn, K, D) block.
    agg_sum = jnp.sum(m, axis=1, dtype=jnp.float32)          # (tn, D) f32
    agg_max = jnp.max(m, axis=1).astype(jnp.float32)         # (tn, D) f32
    agg_min = jnp.min(m, axis=1).astype(jnp.float32)         # (tn, D) f32

    # Fold the sum and mean weights into one scalar: mean = sum * (1/K).
    # Scalar math happens once on the scalar unit, not per vreg.
    w_sum_eff = w_ref[0] + w_ref[1] * (1.0 / k)

    mixed = (w_sum_eff * agg_sum
             + w_ref[2] * agg_max
             + w_ref[3] * agg_min)

    out_ref[...] = mixed.astype(out_ref.dtype)


def agg_mix_op(msg: jax.Array, weights: jax.Array, *, tn: int | None = None) -> jax.Array:
    """Weighted mixture of {sum, mean, max, min} aggregations over axis 1."""
    N, K, D = msg.shape
    assert weights.shape == (NUM_OPS,)
    weights = weights.astype(jnp.float32)

    in_bytes = msg.dtype.itemsize
    out_bytes = in_bytes
    if tn is None:
        tn = _choose_tn(N, K, D, in_bytes, out_bytes)
    tn = max(8, _round_up(tn, 8))

    # Lane-dense output: pad the feature dim to a multiple of 128 if needed
    # (padded features are independent columns; sliced off below).
    D_pad = max(128, _round_up(D, 128))
    if D_pad != D:
        msg = jnp.pad(msg, ((0, 0), (0, 0), (0, D_pad - D)))

    # Pad the node axis so it divides evenly into tiles of tn (padded nodes
    # are zeros; their rows are dropped after the kernel).
    N_pad = _round_up(N, tn)
    if N_pad != N:
        msg = jnp.pad(msg, ((0, N_pad - N), (0, 0), (0, 0)))

    grid = (N_pad // tn,)

    out = pl.pallas_call(
        agg_mix_kernel,
        out_shape=jax.ShapeDtypeStruct((N_pad, D_pad), msg.dtype),
        grid_spec=pltpu.PrefetchScalarGridSpec(
            num_scalar_prefetch=1,            # weights -> SMEM before the grid
            grid=grid,
            in_specs=[
                # messages: tile the node axis, keep (K, D) whole per tile
                pl.BlockSpec((tn, K, D_pad), lambda i, w: (i, 0, 0)),
            ],
            out_specs=pl.BlockSpec((tn, D_pad), lambda i, w: (i, 0)),
        ),
        compiler_params=pltpu.CompilerParams(
            dimension_semantics=("parallel",),
            vmem_limit_bytes=32 * 1024 * 1024,
        ),
    )(weights, msg)

    return out[:N, :D]


def agg_mix_reference(msg, weights):
    ops = [
        jnp.sum(msg, axis=1),
        jnp.mean(msg, axis=1),
        jnp.max(msg, axis=1),
        jnp.min(msg, axis=1),
    ]
    return sum(w * o for w, o in zip(weights, ops))


if __name__ == "__main__":
    key = jax.random.PRNGKey(0)
    k_msg, k_w = jax.random.split(key)

    # Small demo shapes; N is deliberately not a multiple of the tile size to
    # exercise the padding / tail path.
    N, K, D = 50, 8, 128
    msg = jax.random.normal(k_msg, (N, K, D), dtype=jnp.float32)

    # Architecture mixing weights (e.g. a softmax over op logits).
    logits = jax.random.normal(k_w, (NUM_OPS,), dtype=jnp.float32)
    weights = jax.nn.softmax(logits)

    out = agg_mix_op(msg, weights)
    out = jax.block_until_ready(out)

    ref = agg_mix_reference(msg, weights)
    assert out.shape == (N, D)
    assert jnp.allclose(out, ref, atol=1e-5, rtol=1e-5), "mismatch vs reference"

    print("KERNEL_OK")
</pallas_src>

<mosaic_0001>
module attributes {stable_mosaic.version = 11 : i64} {
  func.func @agg_mix_kernel(%arg0: i32, %arg1: memref<4xf32, #tpu.memory_space<smem>>, %arg2: memref<32x8x128xf32, #tpu.memory_space<vmem>>, %arg3: memref<32x128xf32, #tpu.memory_space<vmem>>) attributes {dimension_semantics = [#tpu.dimension_semantics<parallel>], iteration_bounds = array<i64: 2>, scalar_prefetch = 1 : i64, scratch_operands = 0 : i64, tpu.core_type = #tpu.core_type<tc>, window_params = [{transform_indices = @transform_0, window_bounds = array<i64: 32, 8, 128>}, {transform_indices = @transform_1, window_bounds = array<i64: 32, 128>}]} {
    %c0 = arith.constant 0 : index
    %c0_0 = arith.constant 0 : index
    %c0_1 = arith.constant 0 : index
    %0 = vector.load %arg2[%c0, %c0_0, %c0_1] : memref<32x8x128xf32, #tpu.memory_space<vmem>>, vector<32x8x128xf32>
    %cst = arith.constant dense<0.000000e+00> : vector<32x128xf32>
    %1 = vector.multi_reduction <add>, %0, %cst [1] : vector<32x8x128xf32> to vector<32x128xf32>
    %cst_2 = arith.constant dense<0xFF800000> : vector<32x128xf32>
    %2 = vector.multi_reduction <maximumf>, %0, %cst_2 [1] : vector<32x8x128xf32> to vector<32x128xf32>
    %cst_3 = arith.constant dense<0x7F800000> : vector<32x128xf32>
    %3 = vector.multi_reduction <minimumf>, %0, %cst_3 [1] : vector<32x8x128xf32> to vector<32x128xf32>
    %c0_4 = arith.constant 0 : index
    %4 = memref.load %arg1[%c0_4] : memref<4xf32, #tpu.memory_space<smem>>
    %c1 = arith.constant 1 : index
    %5 = memref.load %arg1[%c1] : memref<4xf32, #tpu.memory_space<smem>>
    %cst_5 = arith.constant 1.250000e-01 : f32
    %6 = arith.mulf %5, %cst_5 : f32
    %7 = arith.addf %4, %6 : f32
    %8 = vector.broadcast %7 : f32 to vector<32x128xf32>
    %9 = arith.mulf %8, %1 : vector<32x128xf32>
    %c2 = arith.constant 2 : index
    %10 = memref.load %arg1[%c2] : memref<4xf32, #tpu.memory_space<smem>>
    %11 = vector.broadcast %10 : f32 to vector<32x128xf32>
    %12 = arith.mulf %11, %2 : vector<32x128xf32>
    %13 = arith.addf %9, %12 : vector<32x128xf32>
    %c3 = arith.constant 3 : index
    %14 = memref.load %arg1[%c3] : memref<4xf32, #tpu.memory_space<smem>>
    %15 = vector.broadcast %14 : f32 to vector<32x128xf32>
    %16 = arith.mulf %15, %3 : vector<32x128xf32>
    %17 = arith.addf %13, %16 : vector<32x128xf32>
    %c0_6 = arith.constant 0 : index
    %c0_7 = arith.constant 0 : index
    %18 = vector.load %arg3[%c0_6, %c0_7] : memref<32x128xf32, #tpu.memory_space<vmem>>, vector<32x128xf32>
    tpu.vector_store %arg3[%c0_6, %c0_7], %17 {strides = array<i32>} : memref<32x128xf32, #tpu.memory_space<vmem>>, vector<32x128xf32>,
    return
  }
  func.func @transform_0(%arg0: i32, %arg1: memref<4xf32, #tpu.memory_space<smem>>) -> (i32, i32, i32) {
    %c0_i32 = arith.constant 0 : i32
    %c0_i32_0 = arith.constant 0 : i32
    %c0_i32_1 = arith.constant 0 : i32
    return %arg0, %c0_i32, %c0_i32_0 : i32, i32, i32
  }
  func.func @transform_1(%arg0: i32, %arg1: memref<4xf32, #tpu.memory_space<smem>>) -> (i32, i32) {
    %c0_i32 = arith.constant 0 : i32
    %c0_i32_0 = arith.constant 0 : i32
    return %arg0, %c0_i32 : i32, i32
  }
}

</mosaic_0001>

<llo_original>
// kernel: tpu_custom_call.1
$region0: #{tpu_custom_call.1}
  #allocation0 [shape = 'u32[]', space=smem, size = 0x4, offset = 0x4, fixed_abs, tag = 'smem constant byte address 0x4 - core index']
  #allocation1 [shape = 'u32[144,128]{1,0:T(1,128)}', space=vmem, size = 0x12000, scoped, tag = 'internal scratch']
  #allocation2 [shape = 's32[1]{0}', space=sflag, size = 0x4, scoped, tag = 'scoped memory for tpu_custom_call.1']
  #allocation3 [shape = 'u8[512]{0}', space=smem, size = 0x200, scoped, tag = 'prefetched SMEM operand 0']
  %s0 = inlined_call_operand.hbm [shape: f32[4], index: 0, kind: input, shape index: {}]
  %s1 = inlined_call_operand.hbm [shape: f32[64,8,128], index: 1, kind: input, shape index: {}]
  %s2 = inlined_call_operand.hbm [shape: f32[64,128], index: 2, kind: output, shape index: {}]
  %s3 = sld [smem:[#allocation0]]
  $region41: #{tpu_custom_call.1} parent=0
    _
  %s5 = ssub.s32 1, %s3
  %s6 = scalar_select 0, %s5, %s3
  %8 = dma.hbm_to_smem %s0, 16, [#allocation3], [#allocation2]
  %9 = dma.done [#allocation2], 16
  %10 = sfence
  $region1: #{tpu_custom_call.1} parent=0
    #allocation4 [shape = 'u8[262144]{0}', space=vmem, size = 0x40000, scoped, tag = 'input window, operand 1']
    #allocation5 [shape = 's32[2]{0}', space=sflag, size = 0x8, scoped, tag = 'scoped memory for tpu_custom_call.1']
    #allocation6 [shape = 's32[2]{0}', space=sflag, size = 0x8, scoped, tag = 'scoped memory for tpu_custom_call.1']
    #allocation7 [shape = 'u8[32768]{0}', space=vmem, size = 0x8000, scoped, tag = 'output window, operand 0']
    %11 = vsyncpa [#allocation5], 0
    %s12 = scalar_lea.sflag [#allocation5], 1
    %13 = vsyncpa %s12, 0
    %14 = vsyncpa [#allocation6], 0
    %s15 = scalar_lea.sflag [#allocation6], 1
    %16 = vsyncpa %s15, 0
    loop: start=0, step=1, limit=4
    $region2: #{tpu_custom_call.1} parent=1 // loop_pre_header
      _
    $region3: #{tpu_custom_call.1} parent=1 // loop_header
      %s18 = sphi 0, %s22
      %p19 = scmp.ge.s32.totalorder %s18, 4
      %s28 = sphi 0, %s30
      %s31 = sphi 0, %s28
      %s32 = sphi 0, %s31
      %s48 = sphi 0, %s32
      %s54 = sphi 0, %s56
      %s57 = sphi 0, %s54
      %s58 = sphi 0, %s57
      %s74 = sphi 0, %s58
    $region4: #{tpu_custom_call.1} parent=1 // loop_header_branch
      %21 = sbr.rel (%p19) target = $region8
    $region5: #{tpu_custom_call.1} parent=1 // loop_body
      %s23 = ssub.s32 %s18, 1
      %s24 = ssub.s32 %s18, 2
      %s25 = sadd.s32 %s18, 1
      %s26 = ssub.s32 %s18, %s25
      %p27 = scmp.eq.s32.totalorder %s26, 0
      %s29 = sadd.s32 %s28, 1
      %s30 = scalar_select %p27, %s28, %s29
      %p33 = pneg %p27
      %p34 = scmp.eq.s32.totalorder %s18, 1
      %p35 = por %p33, %p34
      %p36 = scmp.ne.s32.totalorder %s28, %s31
      %p37 = scmp.eq.s32.totalorder %s18, 0
      %p38 = por %p36, %p37
      %p39 = scmp.ne.s32.totalorder %s28, %s31
      %p40 = scmp.eq.s32.totalorder %s23, 1
      %p41 = por %p39, %p40
      %p42 = scmp.ne.s32.totalorder %s31, %s32
      %p43 = scmp.eq.s32.totalorder %s23, 0
      %p44 = por %p42, %p43
      %p45 = scmp.ne.s32.totalorder %s31, %s32
      %p46 = scmp.eq.s32.totalorder %s24, 1
      %p47 = por %p45, %p46
      %p49 = scmp.ne.s32.totalorder %s32, %s48
      %p50 = scmp.eq.s32.totalorder %s24, 0
      %p51 = por %p49, %p50
      %s52 = ssub.s32 %s18, %s25
      %p53 = scmp.eq.s32.totalorder %s52, 0
      %s55 = sadd.s32 %s54, 1
      %s56 = scalar_select %p53, %s54, %s55
      %p59 = pneg %p53
      %p60 = scmp.eq.s32.totalorder %s18, 1
      %p61 = por %p59, %p60
      %p62 = scmp.ne.s32.totalorder %s54, %s57
      %p63 = scmp.eq.s32.totalorder %s18, 0
      %p64 = por %p62, %p63
      %p65 = scmp.ne.s32.totalorder %s54, %s57
      %p66 = scmp.eq.s32.totalorder %s23, 1
      %p67 = por %p65, %p66
      %p68 = scmp.ne.s32.totalorder %s57, %s58
      %p69 = scmp.eq.s32.totalorder %s23, 0
      %p70 = por %p68, %p69
      %p71 = scmp.ne.s32.totalorder %s57, %s58
      %p72 = scmp.eq.s32.totalorder %s24, 1
      %p73 = por %p71, %p72
      %p75 = scmp.ne.s32.totalorder %s58, %s74
      %p76 = scmp.eq.s32.totalorder %s24, 0
      %p77 = por %p75, %p76
      %p78 = scmp.le.s32.totalorder 1, %s18
      %p79 = scmp.lt.s32.totalorder %s18, 3
      %p80 = pnand %p78, %p79
      %p81 = pneg %p80
      // Predicated region
      $region9: #{tpu_custom_call.1} parent=5 // pred_check
        _
      $region10: #{tpu_custom_call.1} parent=5 // pred_check_branch
        %83 = sbr.rel (%p80) target = $region12
      $region11: #{tpu_custom_call.1} parent=5 // pred_region
        %s84 = ssub.s32 %s18, 1
      $region12: #{tpu_custom_call.1} parent=5 // pred_fallthru
        _
      %p85 = scmp.lt.s32.totalorder %s18, 2
      // Predicated region
      $region13: #{tpu_custom_call.1} parent=5 // pred_check
        %p86 = pneg %p85
      $region14: #{tpu_custom_call.1} parent=5 // pred_check_branch
        %88 = sbr.rel (%p86) target = $region16
      $region15: #{tpu_custom_call.1} parent=5 // pred_region
        // Predicated region
        $region17: #{tpu_custom_call.1} parent=15 // pred_check
          %p89 = pneg %p38
        $region18: #{tpu_custom_call.1} parent=15 // pred_check_branch
          %91 = sbr.rel (%p89) target = $region20
        $region19: #{tpu_custom_call.1} parent=15 // pred_region
          %s92 = sand.u32 %s28, 1
          %s93 = scalar_lea.sflag [#allocation5], %s92
          %s94 = sand.u32 %s28, 1
          %s95 = smul.addr %s94, 256
          %s96 = scalar_lea.vmem [#allocation4], %s95
          %s97 = smul.u32 32, %s18
          %s99 = ssub.s32 4096, 4096
          %100 = vsyncadd %s93, %s99
          %s101 = smul.addr %s97, 128
          %s102 = scalar_lea.hbm %s1, %s101
          %s103 = sshll.u32 %s96, 4
          %s104 = int_to_ptr.vmem [resolvable:$true] %s103
          %109 = dma.hbm_to_vmem [thread:$0]  %s102, 4096, %s104, %s93, 128, 128, 8
        $region20: #{tpu_custom_call.1} parent=15 // pred_fallthru
          _
      $region16: #{tpu_custom_call.1} parent=5 // pred_fallthru
        _
      %p110 = scmp.le.s32.totalorder 1, %s18
      %p111 = scmp.lt.s32.totalorder %s18, 3
      %p112 = pnand %p110, %p111
      %p113 = pneg %p112
      // Predicated region
      $region21: #{tpu_custom_call.1} parent=5 // pred_check
        _
      $region22: #{tpu_custom_call.1} parent=5 // pred_check_branch
        %115 = sbr.rel (%p112) target = $region24
      $region23: #{tpu_custom_call.1} parent=5 // pred_region
        %s116 = ssub.s32 %s18, 1
        %s117 = sand.u32 %s31, 1
        %s118 = scalar_lea.sflag [#allocation5], %s117
        %s119 = sand.u32 %s31, 1
        %s120 = smul.addr %s119, 256
        %s121 = scalar_lea.vmem [#allocation4], %s120
        // Predicated region
        $region25: #{tpu_custom_call.1} parent=23 // pred_check
          %p122 = pneg %p44
        $region26: #{tpu_custom_call.1} parent=23 // pred_check_branch
          %124 = sbr.rel (%p122) target = $region28
        $region27: #{tpu_custom_call.1} parent=23 // pred_region
          %125 = dma.done %s118, 4096
        $region28: #{tpu_custom_call.1} parent=23 // pred_fallthru
          _
        %s126 = sand.u32 %s31, 1
        %s127 = scalar_lea.sflag [#allocation5], %s126
        %s128 = sand.u32 %s31, 1
        %s129 = smul.addr %s128, 256
        %s130 = scalar_lea.vmem [#allocation4], %s129
        %p131 = pneg %p44
        %p132 = pneg %p41
        %p133 = pneg %p70
        %p134 = pneg %p67
        %s135 = sand.u32 %s57, 1
        %s136 = scalar_lea.sflag [#allocation6], %s135
        %s137 = sand.u32 %s57, 1
        %s138 = smul.addr %s137, 32
        %s139 = scalar_lea.vmem [#allocation7], %s138
        %s140 = smul.u32 32, %s23
        %s141 = smul.u32 4, %s23
        %v142 = vld [vmem:[%s121] sm:$0xff]
        %v143 = vld [vmem:[%s121 + $0x8] sm:$0xff]
        %v144 = vld [vmem:[%s121 + $0x10] sm:$0xff]
        %v145 = vld [vmem:[%s121 + $0x18] sm:$0xff]
        %v146 = vld [vmem:[%s121 + $0x20] sm:$0xff]
        %v147 = vld [vmem:[%s121 + $0x28] sm:$0xff]
        %v148 = vld [vmem:[%s121 + $0x30] sm:$0xff]
        %v149 = vld [vmem:[%s121 + $0x38] sm:$0xff]
        %v150 = vld [vmem:[%s121 + $0x40] sm:$0xff]
        %v151 = vld [vmem:[%s121 + $0x48] sm:$0xff]
        %v152 = vld [vmem:[%s121 + $0x50] sm:$0xff]
        %v153 = vld [vmem:[%s121 + $0x58] sm:$0xff]
        %v154 = vld [vmem:[%s121 + $0x60] sm:$0xff]
        %v155 = vld [vmem:[%s121 + $0x68] sm:$0xff]
        %v156 = vld [vmem:[%s121 + $0x70] sm:$0xff]
        %v157 = vld [vmem:[%s121 + $0x78] sm:$0xff]
        %v158 = vld [vmem:[%s121 + $0x80] sm:$0xff]
        %v159 = vld [vmem:[%s121 + $0x88] sm:$0xff]
        %v160 = vld [vmem:[%s121 + $0x90] sm:$0xff]
        %v161 = vld [vmem:[%s121 + $0x98] sm:$0xff]
        %v162 = vld [vmem:[%s121 + $0xa0] sm:$0xff]
        %v163 = vld [vmem:[%s121 + $0xa8] sm:$0xff]
        %v164 = vld [vmem:[%s121 + $0xb0] sm:$0xff]
        %v165 = vld [vmem:[%s121 + $0xb8] sm:$0xff]
        %v166 = vld [vmem:[%s121 + $0xc0] sm:$0xff]
        %v167 = vld [vmem:[%s121 + $0xc8] sm:$0xff]
        %v168 = vld [vmem:[%s121 + $0xd0] sm:$0xff]
        %v169 = vld [vmem:[%s121 + $0xd8] sm:$0xff]
        %v170 = vld [vmem:[%s121 + $0xe0] sm:$0xff]
        %v171 = vld [vmem:[%s121 + $0xe8] sm:$0xff]
        %v172 = vld [vmem:[%s121 + $0xf0] sm:$0xff]
        %v173 = vld [vmem:[%s121 + $0xf8] sm:$0xff]
        %v174 = vrot.slane %v142, 4
        %v175 = vadd.f32 %v142, %v174
        %v176 = vrot.slane %v175, 2
        %v177 = vadd.f32 %v175, %v176
        %v178 = vrot.slane %v177, 1
        %v179 = vadd.f32 %v177, %v178
        %v180 = vrot.slane %v143, 4
        %v181 = vadd.f32 %v143, %v180
        %v182 = vrot.slane %v181, 2
        %v183 = vadd.f32 %v181, %v182
        %v184 = vrot.slane %v183, 1
        %v185 = vadd.f32 %v183, %v184
        %v186 = vrot.slane %v144, 4
        %v187 = vadd.f32 %v144, %v186
        %v188 = vrot.slane %v187, 2
        %v189 = vadd.f32 %v187, %v188
        %v190 = vrot.slane %v189, 1
        %v191 = vadd.f32 %v189, %v190
        %v192 = vrot.slane %v145, 4
        %v193 = vadd.f32 %v145, %v192
        %v194 = vrot.slane %v193, 2
        %v195 = vadd.f32 %v193, %v194
        %v196 = vrot.slane %v195, 1
        %v197 = vadd.f32 %v195, %v196
        %v198 = vrot.slane %v146, 4
        %v199 = vadd.f32 %v146, %v198
        %v200 = vrot.slane %v199, 2
        %v201 = vadd.f32 %v199, %v200
        %v202 = vrot.slane %v201, 1
        %v203 = vadd.f32 %v201, %v202
        %v204 = vrot.slane %v147, 4
        %v205 = vadd.f32 %v147, %v204
        %v206 = vrot.slane %v205, 2
        %v207 = vadd.f32 %v205, %v206
        %v208 = vrot.slane %v207, 1
        %v209 = vadd.f32 %v207, %v208
        %v210 = vrot.slane %v148, 4
        %v211 = vadd.f32 %v148, %v210
        %v212 = vrot.slane %v211, 2
        %v213 = vadd.f32 %v211, %v212
        %v214 = vrot.slane %v213, 1
        %v215 = vadd.f32 %v213, %v214
        %v216 = vrot.slane %v149, 4
        %v217 = vadd.f32 %v149, %v216
        %v218 = vrot.slane %v217, 2
        %v219 = vadd.f32 %v217, %v218
        %v220 = vrot.slane %v219, 1
        %v221 = vadd.f32 %v219, %v220
        %v222 = vrot.slane %v150, 4
        %v223 = vadd.f32 %v150, %v222
        %v224 = vrot.slane %v223, 2
        %v225 = vadd.f32 %v223, %v224
        %v226 = vrot.slane %v225, 1
        %v227 = vadd.f32 %v225, %v226
        %v228 = vrot.slane %v151, 4
        %v229 = vadd.f32 %v151, %v228
        %v230 = vrot.slane %v229, 2
        %v231 = vadd.f32 %v229, %v230
        %v232 = vrot.slane %v231, 1
        %v233 = vadd.f32 %v231, %v232
        %v234 = vrot.slane %v152, 4
        %v235 = vadd.f32 %v152, %v234
        %v236 = vrot.slane %v235, 2
        %v237 = vadd.f32 %v235, %v236
        %v238 = vrot.slane %v237, 1
        %v239 = vadd.f32 %v237, %v238
        %v240 = vrot.slane %v153, 4
        %v241 = vadd.f32 %v153, %v240
        %v242 = vrot.slane %v241, 2
        %v243 = vadd.f32 %v241, %v242
        %v244 = vrot.slane %v243, 1
        %v245 = vadd.f32 %v243, %v244
        %v246 = vrot.slane %v154, 4
        %v247 = vadd.f32 %v154, %v246
        %v248 = vrot.slane %v247, 2
        %v249 = vadd.f32 %v247, %v248
        %v250 = vrot.slane %v249, 1
        %v251 = vadd.f32 %v249, %v250
        %v252 = vrot.slane %v155, 4
        %v253 = vadd.f32 %v155, %v252
        %v254 = vrot.slane %v253, 2
        %v255 = vadd.f32 %v253, %v254
        %v256 = vrot.slane %v255, 1
        %v257 = vadd.f32 %v255, %v256
        %v258 = vrot.slane %v156, 4
        %v259 = vadd.f32 %v156, %v258
        %v260 = vrot.slane %v259, 2
        %v261 = vadd.f32 %v259, %v260
        %v262 = vrot.slane %v261, 1
        %v263 = vadd.f32 %v261, %v262
        %v264 = vrot.slane %v157, 4
        %v265 = vadd.f32 %v157, %v264
        %v266 = vrot.slane %v265, 2
        %v267 = vadd.f32 %v265, %v266
        %v268 = vrot.slane %v267, 1
        %v269 = vadd.f32 %v267, %v268
        %v270 = vrot.slane %v158, 4
        %v271 = vadd.f32 %v158, %v270
        %v272 = vrot.slane %v271, 2
        %v273 = vadd.f32 %v271, %v272
        %v274 = vrot.slane %v273, 1
        %v275 = vadd.f32 %v273, %v274
        %v276 = vrot.slane %v159, 4
        %v277 = vadd.f32 %v159, %v276
        %v278 = vrot.slane %v277, 2
        %v279 = vadd.f32 %v277, %v278
        %v280 = vrot.slane %v279, 1
        %v281 = vadd.f32 %v279, %v280
        %v282 = vrot.slane %v160, 4
        %v283 = vadd.f32 %v160, %v282
        %v284 = vrot.slane %v283, 2
        %v285 = vadd.f32 %v283, %v284
        %v286 = vrot.slane %v285, 1
        %v287 = vadd.f32 %v285, %v286
        %v288 = vrot.slane %v161, 4
        %v289 = vadd.f32 %v161, %v288
        %v290 = vrot.slane %v289, 2
        %v291 = vadd.f32 %v289, %v290
        %v292 = vrot.slane %v291, 1
        %v293 = vadd.f32 %v291, %v292
        %v294 = vrot.slane %v162, 4
        %v295 = vadd.f32 %v162, %v294
        %v296 = vrot.slane %v295, 2
        %v297 = vadd.f32 %v295, %v296
        %v298 = vrot.slane %v297, 1
        %v299 = vadd.f32 %v297, %v298
        %v300 = vrot.slane %v163, 4
        %v301 = vadd.f32 %v163, %v300
        %v302 = vrot.slane %v301, 2
        %v303 = vadd.f32 %v301, %v302
        %v304 = vrot.slane %v303, 1
        %v305 = vadd.f32 %v303, %v304
        %v306 = vrot.slane %v164, 4
        %v307 = vadd.f32 %v164, %v306
        %v308 = vrot.slane %v307, 2
        %v309 = vadd.f32 %v307, %v308
        %v310 = vrot.slane %v309, 1
        %v311 = vadd.f32 %v309, %v310
        %v312 = vrot.slane %v165, 4
        %v313 = vadd.f32 %v165, %v312
        %v314 = vrot.slane %v313, 2
        %v315 = vadd.f32 %v313, %v314
        %v316 = vrot.slane %v315, 1
        %v317 = vadd.f32 %v315, %v316
        %v318 = vrot.slane %v166, 4
        %v319 = vadd.f32 %v166, %v318
        %v320 = vrot.slane %v319, 2
        %v321 = vadd.f32 %v319, %v320
        %v322 = vrot.slane %v321, 1
        %v323 = vadd.f32 %v321, %v322
        %v324 = vrot.slane %v167, 4
        %v325 = vadd.f32 %v167, %v324
        %v326 = vrot.slane %v325, 2
        %v327 = vadd.f32 %v325, %v326
        %v328 = vrot.slane %v327, 1
        %v329 = vadd.f32 %v327, %v328
        %v330 = vrot.slane %v168, 4
        %v331 = vadd.f32 %v168, %v330
        %v332 = vrot.slane %v331, 2
        %v333 = vadd.f32 %v331, %v332
        %v334 = vrot.slane %v333, 1
        %v335 = vadd.f32 %v333, %v334
        %v336 = vrot.slane %v169, 4
        %v337 = vadd.f32 %v169, %v336
        %v338 = vrot.slane %v337, 2
        %v339 = vadd.f32 %v337, %v338
        %v340 = vrot.slane %v339, 1
        %v341 = vadd.f32 %v339, %v340
        %v342 = vrot.slane %v170, 4
        %v343 = vadd.f32 %v170, %v342
        %v344 = vrot.slane %v343, 2
        %v345 = vadd.f32 %v343, %v344
        %v346 = vrot.slane %v345, 1
        %v347 = vadd.f32 %v345, %v346
        %v348 = vrot.slane %v171, 4
        %v349 = vadd.f32 %v171, %v348
        %v350 = vrot.slane %v349, 2
        %v351 = vadd.f32 %v349, %v350
        %v352 = vrot.slane %v351, 1
        %v353 = vadd.f32 %v351, %v352
        %v354 = vrot.slane %v172, 4
        %v355 = vadd.f32 %v172, %v354
        %v356 = vrot.slane %v355, 2
        %v357 = vadd.f32 %v355, %v356
        %v358 = vrot.slane %v357, 1
        %v359 = vadd.f32 %v357, %v358
        %v360 = vrot.slane %v173, 4
        %v361 = vadd.f32 %v173, %v360
        %v362 = vrot.slane %v361, 2
        %v363 = vadd.f32 %v361, %v362
        %v364 = vrot.slane %v363, 1
        %v365 = vadd.f32 %v363, %v364
        %v366 = vrot.slane %v142, 4
        %v367 = vmax.f32 %v142, %v366
        %v368 = vrot.slane %v367, 2
        %v369 = vmax.f32 %v367, %v368
        %v370 = vrot.slane %v369, 1
        %v371 = vmax.f32 %v369, %v370
        %v372 = vrot.slane %v143, 4
        %v373 = vmax.f32 %v143, %v372
        %v374 = vrot.slane %v373, 2
        %v375 = vmax.f32 %v373, %v374
        %v376 = vrot.slane %v375, 1
        %v377 = vmax.f32 %v375, %v376
        %v378 = vrot.slane %v144, 4
        %v379 = vmax.f32 %v144, %v378
        %v380 = vrot.slane %v379, 2
        %v381 = vmax.f32 %v379, %v380
        %v382 = vrot.slane %v381, 1
        %v383 = vmax.f32 %v381, %v382
        %v384 = vrot.slane %v145, 4
        %v385 = vmax.f32 %v145, %v384
        %v386 = vrot.slane %v385, 2
        %v387 = vmax.f32 %v385, %v386
        %v388 = vrot.slane %v387, 1
        %v389 = vmax.f32 %v387, %v388
        %v390 = vrot.slane %v146, 4
        %v391 = vmax.f32 %v146, %v390
        %v392 = vrot.slane %v391, 2
        %v393 = vmax.f32 %v391, %v392
        %v394 = vrot.slane %v393, 1
        %v395 = vmax.f32 %v393, %v394
        %v396 = vrot.slane %v147, 4
        %v397 = vmax.f32 %v147, %v396
        %v398 = vrot.slane %v397, 2
        %v399 = vmax.f32 %v397, %v398
        %v400 = vrot.slane %v399, 1
        %v401 = vmax.f32 %v399, %v400
        %v402 = vrot.slane %v148, 4
        %v403 = vmax.f32 %v148, %v402
        %v404 = vrot.slane %v403, 2
        %v405 = vmax.f32 %v403, %v404
        %v406 = vrot.slane %v405, 1
        %v407 = vmax.f32 %v405, %v406
        %v408 = vrot.slane %v149, 4
        %v409 = vmax.f32 %v149, %v408
        %v410 = vrot.slane %v409, 2
        %v411 = vmax.f32 %v409, %v410
        %v412 = vrot.slane %v411, 1
        %v413 = vmax.f32 %v411, %v412
        %v414 = vrot.slane %v150, 4
        %v415 = vmax.f32 %v150, %v414
        %v416 = vrot.slane %v415, 2
        %v417 = vmax.f32 %v415, %v416
        %v418 = vrot.slane %v417, 1
        %v419 = vmax.f32 %v417, %v418
        %v420 = vrot.slane %v151, 4
        %v421 = vmax.f32 %v151, %v420
        %v422 = vrot.slane %v421, 2
        %v423 = vmax.f32 %v421, %v422
        %v424 = vrot.slane %v423, 1
        %v425 = vmax.f32 %v423, %v424
        %v426 = vrot.slane %v152, 4
        %v427 = vmax.f32 %v152, %v426
        %v428 = vrot.slane %v427, 2
        %v429 = vmax.f32 %v427, %v428
        %v430 = vrot.slane %v429, 1
        %v431 = vmax.f32 %v429, %v430
        %v432 = vrot.slane %v153, 4
        %v433 = vmax.f32 %v153, %v432
        %v434 = vrot.slane %v433, 2
        %v435 = vmax.f32 %v433, %v434
        %v436 = vrot.slane %v435, 1
        %v437 = vmax.f32 %v435, %v436
        %v438 = vrot.slane %v154, 4
        %v439 = vmax.f32 %v154, %v438
        %v440 = vrot.slane %v439, 2
        %v441 = vmax.f32 %v439, %v440
        %v442 = vrot.slane %v441, 1
        %v443 = vmax.f32 %v441, %v442
        %v444 = vrot.slane %v155, 4
        %v445 = vmax.f32 %v155, %v444
        %v446 = vrot.slane %v445, 2
        %v447 = vmax.f32 %v445, %v446
        %v448 = vrot.slane %v447, 1
        %v449 = vmax.f32 %v447, %v448
        %v450 = vrot.slane %v156, 4
        %v451 = vmax.f32 %v156, %v450
        %v452 = vrot.slane %v451, 2
        %v453 = vmax.f32 %v451, %v452
        %v454 = vrot.slane %v453, 1
        %v455 = vmax.f32 %v453, %v454
        %v456 = vrot.slane %v157, 4
        %v457 = vmax.f32 %v157, %v456
        %v458 = vrot.slane %v457, 2
        %v459 = vmax.f32 %v457, %v458
        %v460 = vrot.slane %v459, 1
        %v461 = vmax.f32 %v459, %v460
        %v462 = vrot.slane %v158, 4
        %v463 = vmax.f32 %v158, %v462
        %v464 = vrot.slane %v463, 2
        %v465 = vmax.f32 %v463, %v464
        %v466 = vrot.slane %v465, 1
        %v467 = vmax.f32 %v465, %v466
        %v468 = vrot.slane %v159, 4
        %v469 = vmax.f32 %v159, %v468
        %v470 = vrot.slane %v469, 2
        %v471 = vmax.f32 %v469, %v470
        %v472 = vrot.slane %v471, 1
        %v473 = vmax.f32 %v471, %v472
        %v474 = vrot.slane %v160, 4
        %v475 = vmax.f32 %v160, %v474
        %v476 = vrot.slane %v475, 2
        %v477 = vmax.f32 %v475, %v476
        %v478 = vrot.slane %v477, 1
        %v479 = vmax.f32 %v477, %v478
        %v480 = vrot.slane %v161, 4
        %v481 = vmax.f32 %v161, %v480
        %v482 = vrot.slane %v481, 2
        %v483 = vmax.f32 %v481, %v482
        %v484 = vrot.slane %v483, 1
        %v485 = vmax.f32 %v483, %v484
        %v486 = vrot.slane %v162, 4
        %v487 = vmax.f32 %v162, %v486
        %v488 = vrot.slane %v487, 2
        %v489 = vmax.f32 %v487, %v488
        %v490 = vrot.slane %v489, 1
        %v491 = vmax.f32 %v489, %v490
        %v492 = vrot.slane %v163, 4
        %v493 = vmax.f32 %v163, %v492
        %v494 = vrot.slane %v493, 2
        %v495 = vmax.f32 %v493, %v494
        %v496 = vrot.slane %v495, 1
        %v497 = vmax.f32 %v495, %v496
        %v498 = vrot.slane %v164, 4
        %v499 = vmax.f32 %v164, %v498
        %v500 = vrot.slane %v499, 2
        %v501 = vmax.f32 %v499, %v500
        %v502 = vrot.slane %v501, 1
        %v503 = vmax.f32 %v501, %v502
        %v504 = vrot.slane %v165, 4
        %v505 = vmax.f32 %v165, %v504
        %v506 = vrot.slane %v505, 2
        %v507 = vmax.f32 %v505, %v506
        %v508 = vrot.slane %v507, 1
        %v509 = vmax.f32 %v507, %v508
        %v510 = vrot.slane %v166, 4
        %v511 = vmax.f32 %v166, %v510
        %v512 = vrot.slane %v511, 2
        %v513 = vmax.f32 %v511, %v512
        %v514 = vrot.slane %v513, 1
        %v515 = vmax.f32 %v513, %v514
        %v516 = vrot.slane %v167, 4
        %v517 = vmax.f32 %v167, %v516
        %v518 = vrot.slane %v517, 2
        %v519 = vmax.f32 %v517, %v518
        %v520 = vrot.slane %v519, 1
        %v521 = vmax.f32 %v519, %v520
        %v522 = vrot.slane %v168, 4
        %v523 = vmax.f32 %v168, %v522
        %v524 = vrot.slane %v523, 2
        %v525 = vmax.f32 %v523, %v524
        %v526 = vrot.slane %v525, 1
        %v527 = vmax.f32 %v525, %v526
        %v528 = vrot.slane %v169, 4
        %v529 = vmax.f32 %v169, %v528
        %v530 = vrot.slane %v529, 2
        %v531 = vmax.f32 %v529, %v530
        %v532 = vrot.slane %v531, 1
        %v533 = vmax.f32 %v531, %v532
        %v534 = vrot.slane %v170, 4
        %v535 = vmax.f32 %v170, %v534
        %v536 = vrot.slane %v535, 2
        %v537 = vmax.f32 %v535, %v536
        %v538 = vrot.slane %v537, 1
        %v539 = vmax.f32 %v537, %v538
        %v540 = vrot.slane %v171, 4
        %v541 = vmax.f32 %v171, %v540
        %v542 = vrot.slane %v541, 2
        %v543 = vmax.f32 %v541, %v542
        %v544 = vrot.slane %v543, 1
        %v545 = vmax.f32 %v543, %v544
        %v546 = vrot.slane %v172, 4
        %v547 = vmax.f32 %v172, %v546
        %v548 = vrot.slane %v547, 2
        %v549 = vmax.f32 %v547, %v548
        %v550 = vrot.slane %v549, 1
        %v551 = vmax.f32 %v549, %v550
        %v552 = vrot.slane %v173, 4
        %v553 = vmax.f32 %v173, %v552
        %v554 = vrot.slane %v553, 2
        %v555 = vmax.f32 %v553, %v554
        %v556 = vrot.slane %v555, 1
        %v557 = vmax.f32 %v555, %v556
        %v558 = vrot.slane %v142, 4
        %v559 = vmin.f32 %v142, %v558
        %v560 = vrot.slane %v559, 2
        %v561 = vmin.f32 %v559, %v560
        %v562 = vrot.slane %v561, 1
        %v563 = vmin.f32 %v561, %v562
        %v564 = vrot.slane %v143, 4
        %v565 = vmin.f32 %v143, %v564
        %v566 = vrot.slane %v565, 2
        %v567 = vmin.f32 %v565, %v566
        %v568 = vrot.slane %v567, 1
        %v569 = vmin.f32 %v567, %v568
        %v570 = vrot.slane %v144, 4
        %v571 = vmin.f32 %v144, %v570
        %v572 = vrot.slane %v571, 2
        %v573 = vmin.f32 %v571, %v572
        %v574 = vrot.slane %v573, 1
        %v575 = vmin.f32 %v573, %v574
        %v576 = vrot.slane %v145, 4
        %v577 = vmin.f32 %v145, %v576
        %v578 = vrot.slane %v577, 2
        %v579 = vmin.f32 %v577, %v578
        %v580 = vrot.slane %v579, 1
        %v581 = vmin.f32 %v579, %v580
        %v582 = vrot.slane %v146, 4
        %v583 = vmin.f32 %v146, %v582
        %v584 = vrot.slane %v583, 2
        %v585 = vmin.f32 %v583, %v584
        %v586 = vrot.slane %v585, 1
        %v587 = vmin.f32 %v585, %v586
        %v588 = vrot.slane %v147, 4
        %v589 = vmin.f32 %v147, %v588
        %v590 = vrot.slane %v589, 2
        %v591 = vmin.f32 %v589, %v590
        %v592 = vrot.slane %v591, 1
        %v593 = vmin.f32 %v591, %v592
        %v594 = vrot.slane %v148, 4
        %v595 = vmin.f32 %v148, %v594
        %v596 = vrot.slane %v595, 2
        %v597 = vmin.f32 %v595, %v596
        %v598 = vrot.slane %v597, 1
        %v599 = vmin.f32 %v597, %v598
        %v600 = vrot.slane %v149, 4
        %v601 = vmin.f32 %v149, %v600
        %v602 = vrot.slane %v601, 2
        %v603 = vmin.f32 %v601, %v602
        %v604 = vrot.slane %v603, 1
        %v605 = vmin.f32 %v603, %v604
        %v606 = vrot.slane %v150, 4
        %v607 = vmin.f32 %v150, %v606
        %v608 = vrot.slane %v607, 2
        %v609 = vmin.f32 %v607, %v608
        %v610 = vrot.slane %v609, 1
        %v611 = vmin.f32 %v609, %v610
        %v612 = vrot.slane %v151, 4
        %v613 = vmin.f32 %v151, %v612
        %v614 = vrot.slane %v613, 2
        %v615 = vmin.f32 %v613, %v614
        %v616 = vrot.slane %v615, 1
        %v617 = vmin.f32 %v615, %v616
        %v618 = vrot.slane %v152, 4
        %v619 = vmin.f32 %v152, %v618
        %v620 = vrot.slane %v619, 2
        %v621 = vmin.f32 %v619, %v620
        %v622 = vrot.slane %v621, 1
        %v623 = vmin.f32 %v621, %v622
        %v624 = vrot.slane %v153, 4
        %v625 = vmin.f32 %v153, %v624
        %v626 = vrot.slane %v625, 2
        %v627 = vmin.f32 %v625, %v626
        %v628 = vrot.slane %v627, 1
        %v629 = vmin.f32 %v627, %v628
        %v630 = vrot.slane %v154, 4
        %v631 = vmin.f32 %v154, %v630
        %v632 = vrot.slane %v631, 2
        %v633 = vmin.f32 %v631, %v632
        %v634 = vrot.slane %v633, 1
        %v635 = vmin.f32 %v633, %v634
        %v636 = vrot.slane %v155, 4
        %v637 = vmin.f32 %v155, %v636
        %v638 = vrot.slane %v637, 2
        %v639 = vmin.f32 %v637, %v638
        %v640 = vrot.slane %v639, 1
        %v641 = vmin.f32 %v639, %v640
        %v642 = vrot.slane %v156, 4
        %v643 = vmin.f32 %v156, %v642
        %v644 = vrot.slane %v643, 2
        %v645 = vmin.f32 %v643, %v644
        %v646 = vrot.slane %v645, 1
        %v647 = vmin.f32 %v645, %v646
        %v648 = vrot.slane %v157, 4
        %v649 = vmin.f32 %v157, %v648
        %v650 = vrot.slane %v649, 2
        %v651 = vmin.f32 %v649, %v650
        %v652 = vrot.slane %v651, 1
        %v653 = vmin.f32 %v651, %v652
        %v654 = vrot.slane %v158, 4
        %v655 = vmin.f32 %v158, %v654
        %v656 = vrot.slane %v655, 2
        %v657 = vmin.f32 %v655, %v656
        %v658 = vrot.slane %v657, 1
        %v659 = vmin.f32 %v657, %v658
        %v660 = vrot.slane %v159, 4
        %v661 = vmin.f32 %v159, %v660
        %v662 = vrot.slane %v661, 2
        %v663 = vmin.f32 %v661, %v662
        %v664 = vrot.slane %v663, 1
        %v665 = vmin.f32 %v663, %v664
        %v666 = vrot.slane %v160, 4
        %v667 = vmin.f32 %v160, %v666
        %v668 = vrot.slane %v667, 2
        %v669 = vmin.f32 %v667, %v668
        %v670 = vrot.slane %v669, 1
        %v671 = vmin.f32 %v669, %v670
        %v672 = vrot.slane %v161, 4
        %v673 = vmin.f32 %v161, %v672
        %v674 = vrot.slane %v673, 2
        %v675 = vmin.f32 %v673, %v674
        %v676 = vrot.slane %v675, 1
        %v677 = vmin.f32 %v675, %v676
        %v678 = vrot.slane %v162, 4
        %v679 = vmin.f32 %v162, %v678
        %v680 = vrot.slane %v679, 2
        %v681 = vmin.f32 %v679, %v680
        %v682 = vrot.slane %v681, 1
        %v683 = vmin.f32 %v681, %v682
        %v684 = vrot.slane %v163, 4
        %v685 = vmin.f32 %v163, %v684
        %v686 = vrot.slane %v685, 2
        %v687 = vmin.f32 %v685, %v686
        %v688 = vrot.slane %v687, 1
        %v689 = vmin.f32 %v687, %v688
        %v690 = vrot.slane %v164, 4
        %v691 = vmin.f32 %v164, %v690
        %v692 = vrot.slane %v691, 2
        %v693 = vmin.f32 %v691, %v692
        %v694 = vrot.slane %v693, 1
        %v695 = vmin.f32 %v693, %v694
        %v696 = vrot.slane %v165, 4
        %v697 = vmin.f32 %v165, %v696
        %v698 = vrot.slane %v697, 2
        %v699 = vmin.f32 %v697, %v698
        %v700 = vrot.slane %v699, 1
        %v701 = vmin.f32 %v699, %v700
        %v702 = vrot.slane %v166, 4
        %v703 = vmin.f32 %v166, %v702
        %v704 = vrot.slane %v703, 2
        %v705 = vmin.f32 %v703, %v704
        %v706 = vrot.slane %v705, 1
        %v707 = vmin.f32 %v705, %v706
        %v708 = vrot.slane %v167, 4
        %v709 = vmin.f32 %v167, %v708
        %v710 = vrot.slane %v709, 2
        %v711 = vmin.f32 %v709, %v710
        %v712 = vrot.slane %v711, 1
        %v713 = vmin.f32 %v711, %v712
        %v714 = vrot.slane %v168, 4
        %v715 = vmin.f32 %v168, %v714
        %v716 = vrot.slane %v715, 2
        %v717 = vmin.f32 %v715, %v716
        %v718 = vrot.slane %v717, 1
        %v719 = vmin.f32 %v717, %v718
        %v720 = vrot.slane %v169, 4
        %v721 = vmin.f32 %v169, %v720
        %v722 = vrot.slane %v721, 2
        %v723 = vmin.f32 %v721, %v722
        %v724 = vrot.slane %v723, 1
        %v725 = vmin.f32 %v723, %v724
        %v726 = vrot.slane %v170, 4
        %v727 = vmin.f32 %v170, %v726
        %v728 = vrot.slane %v727, 2
        %v729 = vmin.f32 %v727, %v728
        %v730 = vrot.slane %v729, 1
        %v731 = vmin.f32 %v729, %v730
        %v732 = vrot.slane %v171, 4
        %v733 = vmin.f32 %v171, %v732
        %v734 = vrot.slane %v733, 2
        %v735 = vmin.f32 %v733, %v734
        %v736 = vrot.slane %v735, 1
        %v737 = vmin.f32 %v735, %v736
        %v738 = vrot.slane %v172, 4
        %v739 = vmin.f32 %v172, %v738
        %v740 = vrot.slane %v739, 2
        %v741 = vmin.f32 %v739, %v740
        %v742 = vrot.slane %v741, 1
        %v743 = vmin.f32 %v741, %v742
        %v744 = vrot.slane %v173, 4
        %v745 = vmin.f32 %v173, %v744
        %v746 = vrot.slane %v745, 2
        %v747 = vmin.f32 %v745, %v746
        %v748 = vrot.slane %v747, 1
        %v749 = vmin.f32 %v747, %v748
        %s750 = sld [smem:[#allocation3]]
        %s751 = sld [smem:[#allocation3 + $0x1]]
        %s752 = smul.f32 %s751, 0.125
        %s753 = sadd.f32 %s750, %s752
        %v754 = vstv %s753
        %v755 = vmul.f32 %v754, %v179
        %v756 = vmul.f32 %v754, %v185
        %v757 = vmul.f32 %v754, %v191
        %v758 = vmul.f32 %v754, %v197
        %v759 = vmul.f32 %v754, %v203
        %v760 = vmul.f32 %v754, %v209
        %v761 = vmul.f32 %v754, %v215
        %v762 = vmul.f32 %v754, %v221
        %v763 = vmul.f32 %v754, %v227
        %v764 = vmul.f32 %v754, %v233
        %v765 = vmul.f32 %v754, %v239
        %v766 = vmul.f32 %v754, %v245
        %v767 = vmul.f32 %v754, %v251
        %v768 = vmul.f32 %v754, %v257
        %v769 = vmul.f32 %v754, %v263
        %v770 = vmul.f32 %v754, %v269
        %v771 = vmul.f32 %v754, %v275
        %v772 = vmul.f32 %v754, %v281
        %v773 = vmul.f32 %v754, %v287
        %v774 = vmul.f32 %v754, %v293
        %v775 = vmul.f32 %v754, %v299
        %v776 = vmul.f32 %v754, %v305
        %v777 = vmul.f32 %v754, %v311
        %v778 = vmul.f32 %v754, %v317
        %v779 = vmul.f32 %v754, %v323
        %v780 = vmul.f32 %v754, %v329
        %v781 = vmul.f32 %v754, %v335
        %v782 = vmul.f32 %v754, %v341
        %v783 = vmul.f32 %v754, %v347
        %v784 = vmul.f32 %v754, %v353
        %v785 = vmul.f32 %v754, %v359
        %v786 = vmul.f32 %v754, %v365
        %s787 = sld [smem:[#allocation3 + $0x2]]
        %v788 = vstv %s787
        %v789 = vmul.f32 %v788, %v371
        %v790 = vmul.f32 %v788, %v377
        %v791 = vmul.f32 %v788, %v383
        %v792 = vmul.f32 %v788, %v389
        %v793 = vmul.f32 %v788, %v395
        %v794 = vmul.f32 %v788, %v401
        %v795 = vmul.f32 %v788, %v407
        %v796 = vmul.f32 %v788, %v413
        %v797 = vmul.f32 %v788, %v419
        %v798 = vmul.f32 %v788, %v425
        %v799 = vmul.f32 %v788, %v431
        %v800 = vmul.f32 %v788, %v437
        %v801 = vmul.f32 %v788, %v443
        %v802 = vmul.f32 %v788, %v449
        %v803 = vmul.f32 %v788, %v455
        %v804 = vmul.f32 %v788, %v461
        %v805 = vmul.f32 %v788, %v467
        %v806 = vmul.f32 %v788, %v473
        %v807 = vmul.f32 %v788, %v479
        %v808 = vmul.f32 %v788, %v485
        %v809 = vmul.f32 %v788, %v491
        %v810 = vmul.f32 %v788, %v497
        %v811 = vmul.f32 %v788, %v503
        %v812 = vmul.f32 %v788, %v509
        %v813 = vmul.f32 %v788, %v515
        %v814 = vmul.f32 %v788, %v521
        %v815 = vmul.f32 %v788, %v527
        %v816 = vmul.f32 %v788, %v533
        %v817 = vmul.f32 %v788, %v539
        %v818 = vmul.f32 %v788, %v545
        %v819 = vmul.f32 %v788, %v551
        %v820 = vmul.f32 %v788, %v557
        %v821 = vadd.f32 %v755, %v789
        %v822 = vadd.f32 %v756, %v790
        %v823 = vadd.f32 %v757, %v791
        %v824 = vadd.f32 %v758, %v792
        %v825 = vadd.f32 %v759, %v793
        %v826 = vadd.f32 %v760, %v794
        %v827 = vadd.f32 %v761, %v795
        %v828 = vadd.f32 %v762, %v796
        %v829 = vadd.f32 %v763, %v797
        %v830 = vadd.f32 %v764, %v798
        %v831 = vadd.f32 %v765, %v799
        %v832 = vadd.f32 %v766, %v800
        %v833 = vadd.f32 %v767, %v801
        %v834 = vadd.f32 %v768, %v802
        %v835 = vadd.f32 %v769, %v803
        %v836 = vadd.f32 %v770, %v804
        %v837 = vadd.f32 %v771, %v805
        %v838 = vadd.f32 %v772, %v806
        %v839 = vadd.f32 %v773, %v807
        %v840 = vadd.f32 %v774, %v808
        %v841 = vadd.f32 %v775, %v809
        %v842 = vadd.f32 %v776, %v810
        %v843 = vadd.f32 %v777, %v811
        %v844 = vadd.f32 %v778, %v812
        %v845 = vadd.f32 %v779, %v813
        %v846 = vadd.f32 %v780, %v814
        %v847 = vadd.f32 %v781, %v815
        %v848 = vadd.f32 %v782, %v816
        %v849 = vadd.f32 %v783, %v817
        %v850 = vadd.f32 %v784, %v818
        %v851 = vadd.f32 %v785, %v819
        %v852 = vadd.f32 %v786, %v820
        %s853 = sld [smem:[#allocation3 + $0x3]]
        %v854 = vstv %s853
        %v855 = vmul.f32 %v854, %v563
        %v856 = vmul.f32 %v854, %v569
        %v857 = vmul.f32 %v854, %v575
        %v858 = vmul.f32 %v854, %v581
        %v859 = vmul.f32 %v854, %v587
        %v860 = vmul.f32 %v854, %v593
        %v861 = vmul.f32 %v854, %v599
        %v862 = vmul.f32 %v854, %v605
        %v863 = vmul.f32 %v854, %v611
        %v864 = vmul.f32 %v854, %v617
        %v865 = vmul.f32 %v854, %v623
        %v866 = vmul.f32 %v854, %v629
        %v867 = vmul.f32 %v854, %v635
        %v868 = vmul.f32 %v854, %v641
        %v869 = vmul.f32 %v854, %v647
        %v870 = vmul.f32 %v854, %v653
        %v871 = vmul.f32 %v854, %v659
        %v872 = vmul.f32 %v854, %v665
        %v873 = vmul.f32 %v854, %v671
        %v874 = vmul.f32 %v854, %v677
        %v875 = vmul.f32 %v854, %v683
        %v876 = vmul.f32 %v854, %v689
        %v877 = vmul.f32 %v854, %v695
        %v878 = vmul.f32 %v854, %v701
        %v879 = vmul.f32 %v854, %v707
        %v880 = vmul.f32 %v854, %v713
        %v881 = vmul.f32 %v854, %v719
        %v882 = vmul.f32 %v854, %v725
        %v883 = vmul.f32 %v854, %v731
        %v884 = vmul.f32 %v854, %v737
        %v885 = vmul.f32 %v854, %v743
        %v886 = vmul.f32 %v854, %v749
        %v887 = vadd.f32 %v821, %v855
        %v888 = vadd.f32 %v822, %v856
        %v889 = vadd.f32 %v823, %v857
        %v890 = vadd.f32 %v824, %v858
        %v891 = vadd.f32 %v825, %v859
        %v892 = vadd.f32 %v826, %v860
        %v893 = vadd.f32 %v827, %v861
        %v894 = vadd.f32 %v828, %v862
        %v895 = vadd.f32 %v829, %v863
        %v896 = vadd.f32 %v830, %v864
        %v897 = vadd.f32 %v831, %v865
        %v898 = vadd.f32 %v832, %v866
        %v899 = vadd.f32 %v833, %v867
        %v900 = vadd.f32 %v834, %v868
        %v901 = vadd.f32 %v835, %v869
        %v902 = vadd.f32 %v836, %v870
        %v903 = vadd.f32 %v837, %v871
        %v904 = vadd.f32 %v838, %v872
        %v905 = vadd.f32 %v839, %v873
        %v906 = vadd.f32 %v840, %v874
        %v907 = vadd.f32 %v841, %v875
        %v908 = vadd.f32 %v842, %v876
        %v909 = vadd.f32 %v843, %v877
        %v910 = vadd.f32 %v844, %v878
        %v911 = vadd.f32 %v845, %v879
        %v912 = vadd.f32 %v846, %v880
        %v913 = vadd.f32 %v847, %v881
        %v914 = vadd.f32 %v848, %v882
        %v915 = vadd.f32 %v849, %v883
        %v916 = vadd.f32 %v850, %v884
        %v917 = vadd.f32 %v851, %v885
        %v918 = vadd.f32 %v852, %v886
        %vm951 = vcmask 1041409
        %v952 = vsel %vm951, %v888, %v887
        %vm953 = vcmask 1042434
        %v954 = vsel %vm953, %v889, %v952
        %vm955 = vcmask 1043459
        %v956 = vsel %vm955, %v890, %v954
        %vm957 = vcmask 1044484
        %v958 = vsel %vm957, %v891, %v956
        %vm959 = vcmask 1045509
        %v960 = vsel %vm959, %v892, %v958
        %vm961 = vcmask 1046534
        %v962 = vsel %vm961, %v893, %v960
        %vm963 = vcmask 1047559
        %v964 = vsel %vm963, %v894, %v962
        %v965 = vsel %vm951, %v896, %v895
        %v966 = vsel %vm953, %v897, %v965
        %v967 = vsel %vm955, %v898, %v966
        %v968 = vsel %vm957, %v899, %v967
        %v969 = vsel %vm959, %v900, %v968
        %v970 = vsel %vm961, %v901, %v969
        %v971 = vsel %vm963, %v902, %v970
        %v972 = vsel %vm951, %v904, %v903
        %v973 = vsel %vm953, %v905, %v972
        %v974 = vsel %vm955, %v906, %v973
        %v975 = vsel %vm957, %v907, %v974
        %v976 = vsel %vm959, %v908, %v975
        %v977 = vsel %vm961, %v909, %v976
        %v978 = vsel %vm963, %v910, %v977
        %v979 = vsel %vm951, %v912, %v911
        %v980 = vsel %vm953, %v913, %v979
        %v981 = vsel %vm955, %v914, %v980
        %v982 = vsel %vm957, %v915, %v981
        %v983 = vsel %vm959, %v916, %v982
        %v984 = vsel %vm961, %v917, %v983
        %v985 = vsel %vm963, %v918, %v984
        %990 = vst [vmem:[%s139] sm:$0xff] %v964
        %991 = vst [vmem:[%s139 + $0x8] sm:$0xff] %v971
        %992 = vst [vmem:[%s139 + $0x10] sm:$0xff] %v978
        %993 = vst [vmem:[%s139 + $0x18] sm:$0xff] %v985
        %s994 = sand.u32 %s57, 1
        %s995 = scalar_lea.sflag [#allocation6], %s994
        %s996 = sand.u32 %s57, 1
        %s997 = smul.addr %s996, 32
        %s998 = scalar_lea.vmem [#allocation7], %s997
        // Predicated region
        $region29: #{tpu_custom_call.1} parent=23 // pred_check
          %p999 = pneg %p67
        $region30: #{tpu_custom_call.1} parent=23 // pred_check_branch
          %1001 = sbr.rel (%p999) target = $region32
        $region31: #{tpu_custom_call.1} parent=23 // pred_region
          %s1002 = smul.u32 4, %s23
          %s1004 = ssub.s32 512, 512
          %1005 = vsyncadd %s995, %s1004
          %s1006 = smul.addr %s1002, 128
          %s1007 = scalar_lea.hbm %s2, %s1006
          %s1008 = sshll.u32 %s998, 4
          %s1009 = int_to_ptr.vmem [resolvable:$true] %s1008
          %1014 = dma.vmem_to_hbm [thread:$0]  %s1009, 512, %s1007, %s995, 128, 128, 8
        $region32: #{tpu_custom_call.1} parent=23 // pred_fallthru
          _
      $region24: #{tpu_custom_call.1} parent=5 // pred_fallthru
        _
      %p1015 = scmp.le.s32.totalorder 2, %s18
      // Predicated region
      $region33: #{tpu_custom_call.1} parent=5 // pred_check
        %p1016 = pneg %p1015
      $region34: #{tpu_custom_call.1} parent=5 // pred_check_branch
        %1018 = sbr.rel (%p1016) target = $region36
      $region35: #{tpu_custom_call.1} parent=5 // pred_region
        %s1019 = ssub.s32 %s18, 2
        // Predicated region
        $region37: #{tpu_custom_call.1} parent=35 // pred_check
          %p1020 = pneg %p73
        $region38: #{tpu_custom_call.1} parent=35 // pred_check_branch
          %1022 = sbr.rel (%p1020) target = $region40
        $region39: #{tpu_custom_call.1} parent=35 // pred_region
          %s1023 = sand.u32 %s58, 1
          %s1024 = scalar_lea.sflag [#allocation6], %s1023
          %s1025 = sand.u32 %s58, 1
          %s1026 = smul.addr %s1025, 32
          %s1027 = scalar_lea.vmem [#allocation7], %s1026
          %1028 = dma.done %s1024, 512
        $region40: #{tpu_custom_call.1} parent=35 // pred_fallthru
          _
      $region36: #{tpu_custom_call.1} parent=5 // pred_fallthru
        _
    $region6: #{tpu_custom_call.1} parent=1 // loop_footer
      %s22 = sadd.s32 1, %s18
    $region7: #{tpu_custom_call.1} parent=1 // loop_footer_branch
      %17 = sbr.rel target = $region3
    $region8: #{tpu_custom_call.1} parent=1 // loop_exit
      _
    %1029 = vsyncpa [#allocation5], 1
    %s1030 = scalar_lea.sflag [#allocation5], 1
    %1031 = vsyncpa %s1030, 1
    %1032 = vsyncpa [#allocation6], 1
    %s1033 = scalar_lea.sflag [#allocation6], 1
    %1034 = vsyncpa %s1033, 1

</llo_original>
